<compile_context>
chip_gen: v5e
topology: v5e:2x2
jax: 0.10.0
libtpu: 0.0.40
codegen_flags: <defaults>
</compile_context>

<pallas_src>
import functools

import jax
import jax.numpy as jnp
from jax import lax
from jax.experimental import pallas as pl
from jax.experimental.pallas import tpu as pltpu


_NEG_BIG = -1e30                        # finite "-inf" sentinel (no inf-inf NaN)
_TARGET_SLAB_BYTES = 4 * 1024 * 1024    # ~4 MiB queue slab per grid step
_VMEM_LIMIT_BYTES = 32 * 1024 * 1024    # conservative: also fits v7x (64 MiB)


def _detect_num_tensorcores():
    """Best-effort TensorCore count of the local device (v7x has 2 per chip)."""
    try:
        dev = jax.devices()[0]
        n = getattr(dev, "num_cores", None)
        if isinstance(n, int) and n >= 1:
            return n
    except Exception:
        pass
    return 1


def _moco_neg_lse_kernel(q_ref, queue_ref, m_out_ref, s_out_ref, m_sc, s_sc,
                         *, n_k):
    """Online (max, sum-exp) over one (tk, D) tile of the negative queue.

    q_ref holds qrys/T already cast to the queue dtype, so the MXU result is
    directly logits/T.  Grid is (n_par, n_k): axis 0 ("parallel") splits the
    tile range across TensorCores, axis 1 ("arbitrary") streams the tiles of
    that split.  NOTE: the k==0 init must stay before the update (program
    order).
    """
    k = pl.program_id(1)

    @pl.when(k == 0)
    def _init():
        m_sc[...] = jnp.full_like(m_sc, _NEG_BIG)
        s_sc[...] = jnp.zeros_like(s_sc)

    # (N, tk) scaled negative logits; contract over D (queue rows are keys).
    z = lax.dot_general(q_ref[...], queue_ref[...],
                        dimension_numbers=(((1,), (1,)), ((), ())),
                        preferred_element_type=jnp.float32)
    m_tile = jnp.max(z, axis=-1, keepdims=True)
    m_new = jnp.maximum(m_sc[...], m_tile)
    s_sc[...] = (s_sc[...] * jnp.exp(m_sc[...] - m_new)
                 + jnp.sum(jnp.exp(z - m_new), axis=-1, keepdims=True))
    m_sc[...] = m_new

    @pl.when(k == n_k - 1)
    def _final():
        n_rows = m_sc.shape[0]
        m_out_ref[...] = m_sc[...].reshape(1, n_rows, 1)
        s_out_ref[...] = s_sc[...].reshape(1, n_rows, 1)


def unsup_moco_loss(qrys, keys, queue, ptr, *, T=0.07, reduction="mean",
                    tk=None, n_par=None):
    """Forward of UnsupMoCoLoss.

    qrys  : (QV, B, D) f32 query embeddings
    keys  : (KV, B, D) f32 key embeddings
    queue : (K, D) negative queue, rows are keys (f32 or bf16)
    ptr   : (1,) int32 queue pointer
    Returns (loss, new_queue, new_ptr).
    """
    QV, B, D = qrys.shape
    KV = keys.shape[0]
    assert keys.shape == (KV, B, D)
    N = QV * B
    K, Dq = queue.shape
    assert Dq == D and D % 128 == 0

    itemsize = jnp.dtype(queue.dtype).itemsize

    # ---- tile sizing: ~4 MiB slabs regardless of queue dtype ----
    if tk is None:
        tk = max(8, (_TARGET_SLAB_BYTES // (D * itemsize)) // 8 * 8)
    # clamp so the double-buffered queue stream stays well under the VMEM cap
    tk_cap = max(8, ((_VMEM_LIMIT_BYTES * 5 // 8) // (2 * D * itemsize)) // 8 * 8)
    tk = int(min(int(tk), tk_cap))

    if tk >= K:
        tk, n_full, rem = K, 1, 0         # whole queue: one tile, one grid step
    else:
        tk = max(8, tk // 8 * 8)
        n_full = K // tk                  # full tiles streamed by the kernel
        rem = K - n_full * tk             # tail rows (< tk) handled in wrapper

    # ---- core split (v7x): only when it divides the tile count exactly ----
    if n_full <= 1:
        n_par_eff = 1
    else:
        want = int(n_par) if n_par is not None else _detect_num_tensorcores()
        n_par_eff = want if (want > 1 and n_full % want == 0) else 1
    n_k = n_full // n_par_eff

    # ---- fold 1/T into the query; hoist the dtype cast out of the kernel ----
    qflat_f32 = qrys.reshape(N, D).astype(jnp.float32)
    q_scaled = (qflat_f32 * (1.0 / T)).astype(queue.dtype)

    kernel = functools.partial(_moco_neg_lse_kernel, n_k=n_k)

    m_neg3, s_neg3 = pl.pallas_call(
        kernel,
        out_shape=[jax.ShapeDtypeStruct((n_par_eff, N, 1), jnp.float32),
                   jax.ShapeDtypeStruct((n_par_eff, N, 1), jnp.float32)],
        grid_spec=pltpu.PrefetchScalarGridSpec(
            num_scalar_prefetch=0,
            grid=(n_par_eff, n_k),
            in_specs=[
                # small resident query block (constant index map)
                pl.BlockSpec((N, D), lambda p, k: (0, 0)),
                # the HBM stream over the negative queue
                pl.BlockSpec((tk, D), lambda p, k: (p * n_k + k, 0)),
            ],
            out_specs=[
                pl.BlockSpec((1, N, 1), lambda p, k: (p, 0, 0)),
                pl.BlockSpec((1, N, 1), lambda p, k: (p, 0, 0)),
            ],
            scratch_shapes=[pltpu.VMEM((N, 1), jnp.float32),
                            pltpu.VMEM((N, 1), jnp.float32)],
        ),
        compiler_params=pltpu.CompilerParams(
            dimension_semantics=("parallel", "arbitrary"),
            vmem_limit_bytes=_VMEM_LIMIT_BYTES),
    )(q_scaled, queue)

    # ---- positive partial (tiny), remainder tail, log-sum-exp merge ----
    inv_T = 1.0 / T
    pos_z = jnp.einsum("qbd,kbd->qbk", qrys, keys).reshape(N, KV) * inv_T
    m_pos = jnp.max(pos_z, axis=-1)                                   # (N,)
    s_pos = jnp.sum(jnp.exp(pos_z - m_pos[:, None]), axis=-1)         # (N,)

    m_neg = m_neg3[..., 0]                                            # (n_par, N)
    s_neg = s_neg3[..., 0]
    m_all = jnp.maximum(m_pos, jnp.max(m_neg, axis=0))                # (N,)

    if rem > 0:
        tail = queue[n_full * tk:].astype(jnp.float32)                # (rem, D)
        z_tail = (qflat_f32 @ tail.T) * inv_T                         # (N, rem)
        m_tail = jnp.max(z_tail, axis=-1)
        s_tail = jnp.sum(jnp.exp(z_tail - m_tail[:, None]), axis=-1)
        m_all = jnp.maximum(m_all, m_tail)

    s_all = (s_pos * jnp.exp(m_pos - m_all)
             + jnp.sum(s_neg * jnp.exp(m_neg - m_all), axis=0))
    if rem > 0:
        s_all = s_all + s_tail * jnp.exp(m_tail - m_all)

    # loss_r = log(sum_all exp((l-M)/T)) - (sum_kv pos_kv - KV*M)/(T*KV)
    loss_rows = jnp.log(s_all) - (jnp.sum(pos_z, axis=-1) / KV - m_all)
    loss = loss_rows.mean() if reduction == "mean" else loss_rows.sum()

    # ---- queue enqueue/dequeue: one wrap-aware scatter ----
    # (Donate the queue argument in a training step so this lands in place.)
    n_new = KV * B
    keys2 = keys.reshape(n_new, D).astype(queue.dtype)
    rows = (ptr[0].astype(jnp.int32)
            + jnp.arange(n_new, dtype=jnp.int32)) % K
    new_queue = queue.at[rows].set(keys2)
    new_ptr = jnp.reshape((ptr[0] + n_new) % K, (1,)).astype(ptr.dtype)
    return loss, new_queue, new_ptr


def _reference_loss(qrys, keys, queue_kd, T, reduction):
    """Pure-JAX reference mirroring the PyTorch forward (queue stored (K, D))."""
    QV, B, D = qrys.shape
    KV = keys.shape[0]
    new_logits = jnp.sum(qrys[None] * keys[:, None], axis=-1)        # (KV, QV, B)
    new_logits = new_logits.reshape(KV, QV * B)
    old_logits = qrys.reshape(QV * B, D) @ queue_kd.T                # (N, K)
    logits = jnp.concatenate([new_logits.T, old_logits], axis=1)
    logits = logits - jnp.max(logits, axis=1, keepdims=True)
    logits = logits / T
    sim = jnp.concatenate([jnp.ones_like(new_logits.T),
                           jnp.zeros_like(old_logits)], axis=1)
    log_prob = logits - jnp.log(jnp.sum(jnp.exp(logits), axis=1, keepdims=True))
    loss = -(log_prob * sim).sum(axis=1) / sim.sum(axis=1)
    return loss.mean() if reduction == "mean" else loss.sum()


if __name__ == "__main__":
    # Small shapes consistent with the module: key_dim=128, queue length K=512,
    # QV=4 query views, KV=4 key views, batch B=2.
    QV, KV, B, D, K, T = 4, 4, 2, 128, 512, 0.07

    key = jax.random.PRNGKey(0)
    k_q, k_k, k_queue = jax.random.split(key, 3)
    qrys = jax.random.normal(k_q, (QV, B, D), dtype=jnp.float32)
    keys = jax.random.normal(k_k, (KV, B, D), dtype=jnp.float32)

    # Buffer init matching F.normalize(torch.randn(key_dim, K)) (dim=1),
    # stored transposed as (K, D) rows.
    qdk = jax.random.normal(k_queue, (D, K), dtype=jnp.float32)
    qdk = qdk / jnp.linalg.norm(qdk, axis=1, keepdims=True)
    queue = qdk.T                                  # (K, D)
    ptr = jnp.zeros((1,), dtype=jnp.int32)

    ref = _reference_loss(qrys, keys, queue, T, "mean")

    # 1) Default path: whole (small) queue in one ~4 MiB-capped tile, f32.
    fn = jax.jit(functools.partial(unsup_moco_loss, T=T, reduction="mean"))
    loss, new_queue, new_ptr = fn(qrys, keys, queue, ptr)
    jax.block_until_ready((loss, new_queue, new_ptr))
    assert jnp.allclose(loss, ref, rtol=1e-4, atol=1e-4), (loss, ref)
    assert int(new_ptr[0]) == (KV * B) % K
    k2 = keys.reshape(KV * B, D)
    assert jnp.allclose(new_queue[:KV * B], k2)
    assert jnp.allclose(new_queue[KV * B:], queue[KV * B:])

    # 1b) Wrap-around enqueue path (single scatter handles the wrap).
    ptr_wrap = jnp.array([K - 3], dtype=jnp.int32)
    loss_w, queue_w, ptr_w = fn(qrys, keys, queue, ptr_wrap)
    jax.block_until_ready((loss_w, queue_w, ptr_w))
    assert int(ptr_w[0]) == (K - 3 + KV * B) % K
    assert jnp.allclose(queue_w[K - 3:], k2[:3])
    assert jnp.allclose(queue_w[:KV * B - 3], k2[3:])

    # 2) Multi-tile online-LSE path with a wrapper-merged tail (no padding).
    fn2 = jax.jit(functools.partial(unsup_moco_loss, T=T, reduction="mean",
                                    tk=192))
    loss2, _, _ = fn2(qrys, keys, queue, ptr)
    jax.block_until_ready(loss2)
    assert jnp.allclose(loss2, ref, rtol=1e-4, atol=1e-4), (loss2, ref)

    # 2b) Explicit 2-way TensorCore split of the tile range (serial on 1-TC).
    fn2b = jax.jit(functools.partial(unsup_moco_loss, T=T, reduction="mean",
                                     tk=128, n_par=2))
    loss2b, _, _ = fn2b(qrys, keys, queue, ptr)
    jax.block_until_ready(loss2b)
    assert jnp.allclose(loss2b, ref, rtol=1e-4, atol=1e-4), (loss2b, ref)

    # 3) bf16 negative-queue streaming (half the HBM bytes on the hot path).
    #    Negatives are computed from a bf16 query/queue (f32 accumulation);
    #    the positive logits stay f32 in the wrapper -- intentional asymmetry.
    queue_bf16 = queue.astype(jnp.bfloat16)
    ref_bf16 = _reference_loss(qrys, keys, queue_bf16.astype(jnp.float32),
                               T, "mean")
    loss3, queue3, _ = fn(qrys, keys, queue_bf16, ptr)
    jax.block_until_ready((loss3, queue3))
    assert jnp.allclose(loss3, ref_bf16, rtol=5e-3, atol=5e-3), (loss3, ref_bf16)

    print("KERNEL_OK")
</pallas_src>

<mosaic_0001>
module attributes {stable_mosaic.version = 11 : i64} {
  func.func @_moco_neg_lse_kernel(%arg0: i32, %arg1: i32, %arg2: memref<8x128xf32, #tpu.memory_space<vmem>>, %arg3: memref<512x128xf32, #tpu.memory_space<vmem>>, %arg4: memref<1x8x1xf32, #tpu.memory_space<vmem>>, %arg5: memref<1x8x1xf32, #tpu.memory_space<vmem>>, %arg6: memref<8x1xf32, #tpu.memory_space<vmem>>, %arg7: memref<8x1xf32, #tpu.memory_space<vmem>>) attributes {dimension_semantics = [#tpu.dimension_semantics<parallel>, #tpu.dimension_semantics<arbitrary>], iteration_bounds = array<i64: 1, 1>, scalar_prefetch = 0 : i64, scratch_operands = 2 : i64, tpu.core_type = #tpu.core_type<tc>, window_params = [{pipeline_mode = #tpu.pipeline_mode<synchronous>, transform_indices = @transform_0, window_bounds = array<i64: 8, 128>}, {transform_indices = @transform_1, window_bounds = array<i64: 512, 128>}, {transform_indices = @transform_2, window_bounds = array<i64: 1, 8, 1>}, {transform_indices = @transform_3, window_bounds = array<i64: 1, 8, 1>}]} {
    %c0_i32 = arith.constant 0 : i32
    %0 = arith.cmpi eq, %arg1, %c0_i32 : i32
    %1 = arith.extui %0 : i1 to i32
    %c0_i32_0 = arith.constant 0 : i32
    %2 = arith.cmpi ne, %1, %c0_i32_0 : i32
    scf.if %2 {
      %cst_18 = arith.constant -1.000000e+30 : f32
      %26 = vector.broadcast %cst_18 : f32 to vector<8x1xf32>
      %c0_19 = arith.constant 0 : index
      %c0_20 = arith.constant 0 : index
      %27 = vector.load %arg6[%c0_19, %c0_20] : memref<8x1xf32, #tpu.memory_space<vmem>>, vector<8x1xf32>
      tpu.vector_store %arg6[%c0_19, %c0_20], %26 {strides = array<i32>} : memref<8x1xf32, #tpu.memory_space<vmem>>, vector<8x1xf32>,
      %cst_21 = arith.constant 0.000000e+00 : f32
      %28 = vector.broadcast %cst_21 : f32 to vector<8x1xf32>
      %c0_22 = arith.constant 0 : index
      %c0_23 = arith.constant 0 : index
      %29 = vector.load %arg7[%c0_22, %c0_23] : memref<8x1xf32, #tpu.memory_space<vmem>>, vector<8x1xf32>
      tpu.vector_store %arg7[%c0_22, %c0_23], %28 {strides = array<i32>} : memref<8x1xf32, #tpu.memory_space<vmem>>, vector<8x1xf32>,
    } else {
    }
    %c0 = arith.constant 0 : index
    %c0_1 = arith.constant 0 : index
    %3 = vector.load %arg2[%c0, %c0_1] : memref<8x128xf32, #tpu.memory_space<vmem>>, vector<8x128xf32>
    %c0_2 = arith.constant 0 : index
    %c0_3 = arith.constant 0 : index
    %4 = vector.load %arg3[%c0_2, %c0_3] : memref<512x128xf32, #tpu.memory_space<vmem>>, vector<512x128xf32>
    %cst = arith.constant dense<0.000000e+00> : vector<8x512xf32>
    %5 = tpu.matmul %3, %4, %cst {dimension_numbers = #tpu.dot_dimension_numbers<[1], [1], [0], [0], [0, 0, 1, 0], [], []>} : vector<8x128xf32>, vector<512x128xf32>, vector<8x512xf32> -> vector<8x512xf32>
    %cst_4 = arith.constant dense<0xFF800000> : vector<8xf32>
    %6 = vector.multi_reduction <maximumf>, %5, %cst_4 [1] : vector<8x512xf32> to vector<8xf32>
    %7 = vector.shape_cast %6 : vector<8xf32> to vector<8x1xf32>
    %c0_5 = arith.constant 0 : index
    %c0_6 = arith.constant 0 : index
    %8 = vector.load %arg6[%c0_5, %c0_6] : memref<8x1xf32, #tpu.memory_space<vmem>>, vector<8x1xf32>
    %9 = arith.maximumf %8, %7 : vector<8x1xf32>
    %c0_7 = arith.constant 0 : index
    %c0_8 = arith.constant 0 : index
    %10 = vector.load %arg7[%c0_7, %c0_8] : memref<8x1xf32, #tpu.memory_space<vmem>>, vector<8x1xf32>
    %c0_9 = arith.constant 0 : index
    %c0_10 = arith.constant 0 : index
    %11 = vector.load %arg6[%c0_9, %c0_10] : memref<8x1xf32, #tpu.memory_space<vmem>>, vector<8x1xf32>
    %12 = arith.subf %11, %9 : vector<8x1xf32>
    %13 = math.exp %12 : vector<8x1xf32>
    %14 = arith.mulf %10, %13 : vector<8x1xf32>
    %15 = vector.broadcast %9 : vector<8x1xf32> to vector<8x512xf32>
    %16 = arith.subf %5, %15 : vector<8x512xf32>
    %17 = math.exp %16 : vector<8x512xf32>
    %cst_11 = arith.constant dense<0.000000e+00> : vector<8xf32>
    %18 = vector.multi_reduction <add>, %17, %cst_11 [1] : vector<8x512xf32> to vector<8xf32>
    %19 = vector.shape_cast %18 : vector<8xf32> to vector<8x1xf32>
    %20 = arith.addf %14, %19 : vector<8x1xf32>
    %c0_12 = arith.constant 0 : index
    %c0_13 = arith.constant 0 : index
    %21 = vector.load %arg7[%c0_12, %c0_13] : memref<8x1xf32, #tpu.memory_space<vmem>>, vector<8x1xf32>
    tpu.vector_store %arg7[%c0_12, %c0_13], %20 {strides = array<i32>} : memref<8x1xf32, #tpu.memory_space<vmem>>, vector<8x1xf32>,
    %c0_14 = arith.constant 0 : index
    %c0_15 = arith.constant 0 : index
    %22 = vector.load %arg6[%c0_14, %c0_15] : memref<8x1xf32, #tpu.memory_space<vmem>>, vector<8x1xf32>
    tpu.vector_store %arg6[%c0_14, %c0_15], %9 {strides = array<i32>} : memref<8x1xf32, #tpu.memory_space<vmem>>, vector<8x1xf32>,
    %c0_i32_16 = arith.constant 0 : i32
    %23 = arith.cmpi eq, %arg1, %c0_i32_16 : i32
    %24 = arith.extui %23 : i1 to i32
    %c0_i32_17 = arith.constant 0 : i32
    %25 = arith.cmpi ne, %24, %c0_i32_17 : i32
    scf.if %25 {
      %c0_18 = arith.constant 0 : index
      %c0_19 = arith.constant 0 : index
      %26 = vector.load %arg6[%c0_18, %c0_19] : memref<8x1xf32, #tpu.memory_space<vmem>>, vector<8x1xf32>
      %27 = vector.shape_cast %26 : vector<8x1xf32> to vector<1x8x1xf32>
      %c0_20 = arith.constant 0 : index
      %c0_21 = arith.constant 0 : index
      %c0_22 = arith.constant 0 : index
      %28 = vector.load %arg4[%c0_20, %c0_21, %c0_22] : memref<1x8x1xf32, #tpu.memory_space<vmem>>, vector<1x8x1xf32>
      tpu.vector_store %arg4[%c0_20, %c0_21, %c0_22], %27 {strides = array<i32>} : memref<1x8x1xf32, #tpu.memory_space<vmem>>, vector<1x8x1xf32>,
      %c0_23 = arith.constant 0 : index
      %c0_24 = arith.constant 0 : index
      %29 = vector.load %arg7[%c0_23, %c0_24] : memref<8x1xf32, #tpu.memory_space<vmem>>, vector<8x1xf32>
      %30 = vector.shape_cast %29 : vector<8x1xf32> to vector<1x8x1xf32>
      %c0_25 = arith.constant 0 : index
      %c0_26 = arith.constant 0 : index
      %c0_27 = arith.constant 0 : index
      %31 = vector.load %arg5[%c0_25, %c0_26, %c0_27] : memref<1x8x1xf32, #tpu.memory_space<vmem>>, vector<1x8x1xf32>
      tpu.vector_store %arg5[%c0_25, %c0_26, %c0_27], %30 {strides = array<i32>} : memref<1x8x1xf32, #tpu.memory_space<vmem>>, vector<1x8x1xf32>,
    } else {
    }
    return
  }
  func.func @transform_0(%arg0: i32, %arg1: i32) -> (i32, i32) {
    %c0_i32 = arith.constant 0 : i32
    %c0_i32_0 = arith.constant 0 : i32
    %c0_i32_1 = arith.constant 0 : i32
    return %c0_i32, %c0_i32_0 : i32, i32
  }
  func.func @transform_1(%arg0: i32, %arg1: i32) -> (i32, i32) {
    %c1_i32 = arith.constant 1 : i32
    %0 = arith.muli %arg0, %c1_i32 : i32
    %1 = arith.addi %0, %arg1 : i32
    %c0_i32 = arith.constant 0 : i32
    %c0_i32_0 = arith.constant 0 : i32
    return %1, %c0_i32 : i32, i32
  }
  func.func @transform_2(%arg0: i32, %arg1: i32) -> (i32, i32, i32) {
    %c0_i32 = arith.constant 0 : i32
    %c0_i32_0 = arith.constant 0 : i32
    %c0_i32_1 = arith.constant 0 : i32
    return %arg0, %c0_i32, %c0_i32_0 : i32, i32, i32
  }
  func.func @transform_3(%arg0: i32, %arg1: i32) -> (i32, i32, i32) {
    %c0_i32 = arith.constant 0 : i32
    %c0_i32_0 = arith.constant 0 : i32
    %c0_i32_1 = arith.constant 0 : i32
    return %arg0, %c0_i32, %c0_i32_0 : i32, i32, i32
  }
}

</mosaic_0001>

<llo_original>
// kernel: unsup_moco_loss.1
$region0: #{unsup_moco_loss.1}
  #allocation0 [shape = 'u32[]', space=smem, size = 0x4, offset = 0x4, fixed_abs, tag = 'smem constant byte address 0x4 - core index']
  #allocation1 [shape = 'u32[72,128]{1,0:T(1,128)}', space=vmem, size = 0x9000, scoped, tag = 'internal scratch']
  #allocation2 [shape = 'f32[8,1]{1,0:T(8,128)}', space=vmem, size = 0x1000, scoped, tag = 'scratch operand']
  #allocation3 [shape = 'f32[8,1]{1,0:T(8,128)}', space=vmem, size = 0x1000, scoped, tag = 'scratch operand']
  %s0 = inlined_call_operand.vmem [shape: f32[8,128], index: 0, kind: input, shape index: {}]
  %s1 = inlined_call_operand.vmem [shape: f32[512,128], index: 1, kind: input, shape index: {}]
  %s2 = inlined_call_operand.vmem [shape: f32[1,8,1], index: 2, kind: output, shape index: {0}]
  %s3 = inlined_call_operand.vmem [shape: f32[1,8,1], index: 3, kind: output, shape index: {1}]
  %4 = xla_tuple %s2, %s3
  %s5 = sld [smem:[#allocation0]]
  $region34: #{unsup_moco_loss.1} parent=0
    _
  %s7 = ssub.s32 1, %s5
  %s8 = scalar_select 0, %s7, %s5
  // Predicated region
  $region2: #{unsup_moco_loss.1} parent=0 // pred_check
    _
  $region3: #{unsup_moco_loss.1} parent=0 // pred_check_branch
    %10 = sbr.rel (0) target = $region5
  $region4: #{unsup_moco_loss.1} parent=0 // pred_region
    _
  $region5: #{unsup_moco_loss.1} parent=0 // pred_fallthru
    _
  // Predicated region
  $region6: #{unsup_moco_loss.1} parent=0 // pred_check
    _
  $region7: #{unsup_moco_loss.1} parent=0 // pred_check_branch
    %12 = sbr.rel (0) target = $region9
  $region8: #{unsup_moco_loss.1} parent=0 // pred_region
    %s13 = sadd.s32 0, 0
    %s14 = smul.u32 64, %s13
    %p15 = scmp.lt.s32.totalorder %s14, 63
    %s16 = scalar_select %p15, %s14, 63
    %s17 = smul.addr %s16, 8
    %s18 = scalar_lea.vmem %s1, %s17
    %s19 = sadd.s32 0, 0
    %s20 = smul.u32 64, %s19
  $region9: #{unsup_moco_loss.1} parent=0 // pred_fallthru
    _
  %s21 = sadd.s32 0, 0
  %s22 = smul.u32 64, %s21
  %p23 = scmp.lt.s32.totalorder %s22, 63
  %s24 = scalar_select %p23, %s22, 63
  %s25 = smul.addr %s24, 8
  %s26 = scalar_lea.vmem %s1, %s25
  %s27 = sadd.s32 0, 0
  %s28 = smul.u32 64, %s27
  %p29 = scmp.lt.s32.totalorder %s28, 63
  %s30 = scalar_select %p29, %s28, 63
  %s31 = smul.addr %s30, 8
  %s32 = scalar_lea.vmem %s1, %s31
  %s33 = sadd.s32 0, 0
  %s34 = smul.u32 64, %s33
  %p35 = scmp.eq.s32.totalorder 0, 0
  // Predicated region
  $region10: #{unsup_moco_loss.1} parent=0 // pred_check
    %p36 = pneg %p35
  $region11: #{unsup_moco_loss.1} parent=0 // pred_check_branch
    %38 = sbr.rel (%p36) target = $region13
  $region12: #{unsup_moco_loss.1} parent=0 // pred_region
    %vm39 = vcmask 7168
    %40 = vst.msk [vmem:[#allocation2] sm:$0xff] %vm39, -1e+30
    %41 = vst.msk [vmem:[#allocation3] sm:$0xff] %vm39, 0.0
  $region13: #{unsup_moco_loss.1} parent=0 // pred_fallthru
    _
  %v42 = vld [vmem:[%s0] sm:$0xff]
  %v43 = vld [vmem:[%s32] sm:$0xff]
  %v44 = vld [vmem:[%s32 + $0x8] sm:$0xff]
  %v45 = vld [vmem:[%s32 + $0x10] sm:$0xff]
  %v46 = vld [vmem:[%s32 + $0x18] sm:$0xff]
  %v47 = vld [vmem:[%s32 + $0x20] sm:$0xff]
  %v48 = vld [vmem:[%s32 + $0x28] sm:$0xff]
  %v49 = vld [vmem:[%s32 + $0x30] sm:$0xff]
  %v50 = vld [vmem:[%s32 + $0x38] sm:$0xff]
  %v51 = vld [vmem:[%s32 + $0x40] sm:$0xff]
  %v52 = vld [vmem:[%s32 + $0x48] sm:$0xff]
  %v53 = vld [vmem:[%s32 + $0x50] sm:$0xff]
  %v54 = vld [vmem:[%s32 + $0x58] sm:$0xff]
  %v55 = vld [vmem:[%s32 + $0x60] sm:$0xff]
  %v56 = vld [vmem:[%s32 + $0x68] sm:$0xff]
  %v57 = vld [vmem:[%s32 + $0x70] sm:$0xff]
  %v58 = vld [vmem:[%s32 + $0x78] sm:$0xff]
  %v59 = vld [vmem:[%s32 + $0x80] sm:$0xff]
  %v60 = vld [vmem:[%s32 + $0x88] sm:$0xff]
  %v61 = vld [vmem:[%s32 + $0x90] sm:$0xff]
  %v62 = vld [vmem:[%s32 + $0x98] sm:$0xff]
  %v63 = vld [vmem:[%s32 + $0xa0] sm:$0xff]
  %v64 = vld [vmem:[%s32 + $0xa8] sm:$0xff]
  %v65 = vld [vmem:[%s32 + $0xb0] sm:$0xff]
  %v66 = vld [vmem:[%s32 + $0xb8] sm:$0xff]
  %v67 = vld [vmem:[%s32 + $0xc0] sm:$0xff]
  %v68 = vld [vmem:[%s32 + $0xc8] sm:$0xff]
  %v69 = vld [vmem:[%s32 + $0xd0] sm:$0xff]
  %v70 = vld [vmem:[%s32 + $0xd8] sm:$0xff]
  %v71 = vld [vmem:[%s32 + $0xe0] sm:$0xff]
  %v72 = vld [vmem:[%s32 + $0xe8] sm:$0xff]
  %v73 = vld [vmem:[%s32 + $0xf0] sm:$0xff]
  %v74 = vld [vmem:[%s32 + $0xf8] sm:$0xff]
  %v75 = vld [vmem:[%s32 + $0x100] sm:$0xff]
  %v76 = vld [vmem:[%s32 + $0x108] sm:$0xff]
  %v77 = vld [vmem:[%s32 + $0x110] sm:$0xff]
  %v78 = vld [vmem:[%s32 + $0x118] sm:$0xff]
  %v79 = vld [vmem:[%s32 + $0x120] sm:$0xff]
  %v80 = vld [vmem:[%s32 + $0x128] sm:$0xff]
  %v81 = vld [vmem:[%s32 + $0x130] sm:$0xff]
  %v82 = vld [vmem:[%s32 + $0x138] sm:$0xff]
  %v83 = vld [vmem:[%s32 + $0x140] sm:$0xff]
  %v84 = vld [vmem:[%s32 + $0x148] sm:$0xff]
  %v85 = vld [vmem:[%s32 + $0x150] sm:$0xff]
  %v86 = vld [vmem:[%s32 + $0x158] sm:$0xff]
  %v87 = vld [vmem:[%s32 + $0x160] sm:$0xff]
  %v88 = vld [vmem:[%s32 + $0x168] sm:$0xff]
  %v89 = vld [vmem:[%s32 + $0x170] sm:$0xff]
  %v90 = vld [vmem:[%s32 + $0x178] sm:$0xff]
  %v91 = vld [vmem:[%s32 + $0x180] sm:$0xff]
  %v92 = vld [vmem:[%s32 + $0x188] sm:$0xff]
  %v93 = vld [vmem:[%s32 + $0x190] sm:$0xff]
  %v94 = vld [vmem:[%s32 + $0x198] sm:$0xff]
  %v95 = vld [vmem:[%s32 + $0x1a0] sm:$0xff]
  %v96 = vld [vmem:[%s32 + $0x1a8] sm:$0xff]
  %v97 = vld [vmem:[%s32 + $0x1b0] sm:$0xff]
  %v98 = vld [vmem:[%s32 + $0x1b8] sm:$0xff]
  %v99 = vld [vmem:[%s32 + $0x1c0] sm:$0xff]
  %v100 = vld [vmem:[%s32 + $0x1c8] sm:$0xff]
  %v101 = vld [vmem:[%s32 + $0x1d0] sm:$0xff]
  %v102 = vld [vmem:[%s32 + $0x1d8] sm:$0xff]
  %v103 = vld [vmem:[%s32 + $0x1e0] sm:$0xff]
  %v104 = vld [vmem:[%s32 + $0x1e8] sm:$0xff]
  %v105 = vld [vmem:[%s32 + $0x1f0] sm:$0xff]
  %v106 = vld [vmem:[%s32 + $0x1f8] sm:$0xff]
  %107 = vmatpush.xpose.msra.mxu0 %v58
  %108 = vmatpush.xpose.msra.mxu0 %v57
  %109 = vmatpush.xpose.msra.mxu0 %v56
  %110 = vmatpush.xpose.msra.mxu0 %v55
  %111 = vmatpush.xpose.msra.mxu0 %v54
  %112 = vmatpush.xpose.msra.mxu0 %v53
  %113 = vmatpush.xpose.msra.mxu0 %v52
  %114 = vmatpush.xpose.msra.mxu0 %v51
  %115 = vmatpush.xpose.msra.mxu0 %v50
  %116 = vmatpush.xpose.msra.mxu0 %v49
  %117 = vmatpush.xpose.msra.mxu0 %v48
  %118 = vmatpush.xpose.msra.mxu0 %v47
  %119 = vmatpush.xpose.msra.mxu0 %v46
  %120 = vmatpush.xpose.msra.mxu0 %v45
  %121 = vmatpush.xpose.msra.mxu0 %v44
  %122 = vmatpush.xpose.msra.mxu0 %v43
  %123 = vmatmul.f32.gmra.mxu0 %v42
  %v124 = vpop.f32.mrf.mxu0
  %v125 = vadd.f32 0.0, %v124
  %126 = vdwg.mxu0
  %127 = vmatpush.xpose.msra.mxu0 %v74
  %128 = vmatpush.xpose.msra.mxu0 %v73
  %129 = vmatpush.xpose.msra.mxu0 %v72
  %130 = vmatpush.xpose.msra.mxu0 %v71
  %131 = vmatpush.xpose.msra.mxu0 %v70
  %132 = vmatpush.xpose.msra.mxu0 %v69
  %133 = vmatpush.xpose.msra.mxu0 %v68
  %134 = vmatpush.xpose.msra.mxu0 %v67
  %135 = vmatpush.xpose.msra.mxu0 %v66
  %136 = vmatpush.xpose.msra.mxu0 %v65
  %137 = vmatpush.xpose.msra.mxu0 %v64
  %138 = vmatpush.xpose.msra.mxu0 %v63
  %139 = vmatpush.xpose.msra.mxu0 %v62
  %140 = vmatpush.xpose.msra.mxu0 %v61
  %141 = vmatpush.xpose.msra.mxu0 %v60
  %142 = vmatpush.xpose.msra.mxu0 %v59
  %143 = vmatmul.f32.gmra.mxu0 %v42
  %v144 = vpop.f32.mrf.mxu0
  %v145 = vadd.f32 0.0, %v144
  %146 = vdwg.mxu0
  %147 = vmatpush.xpose.msra.mxu0 %v90
  %148 = vmatpush.xpose.msra.mxu0 %v89
  %149 = vmatpush.xpose.msra.mxu0 %v88
  %150 = vmatpush.xpose.msra.mxu0 %v87
  %151 = vmatpush.xpose.msra.mxu0 %v86
  %152 = vmatpush.xpose.msra.mxu0 %v85
  %153 = vmatpush.xpose.msra.mxu0 %v84
  %154 = vmatpush.xpose.msra.mxu0 %v83
  %155 = vmatpush.xpose.msra.mxu0 %v82
  %156 = vmatpush.xpose.msra.mxu0 %v81
  %157 = vmatpush.xpose.msra.mxu0 %v80
  %158 = vmatpush.xpose.msra.mxu0 %v79
  %159 = vmatpush.xpose.msra.mxu0 %v78
  %160 = vmatpush.xpose.msra.mxu0 %v77
  %161 = vmatpush.xpose.msra.mxu0 %v76
  %162 = vmatpush.xpose.msra.mxu0 %v75
  %163 = vmatmul.f32.gmra.mxu0 %v42
  %v164 = vpop.f32.mrf.mxu0
  %v165 = vadd.f32 0.0, %v164
  %166 = vdwg.mxu0
  %167 = vmatpush.xpose.msra.mxu0 %v106
  %168 = vmatpush.xpose.msra.mxu0 %v105
  %169 = vmatpush.xpose.msra.mxu0 %v104
  %170 = vmatpush.xpose.msra.mxu0 %v103
  %171 = vmatpush.xpose.msra.mxu0 %v102
  %172 = vmatpush.xpose.msra.mxu0 %v101
  %173 = vmatpush.xpose.msra.mxu0 %v100
  %174 = vmatpush.xpose.msra.mxu0 %v99
  %175 = vmatpush.xpose.msra.mxu0 %v98
  %176 = vmatpush.xpose.msra.mxu0 %v97
  %177 = vmatpush.xpose.msra.mxu0 %v96
  %178 = vmatpush.xpose.msra.mxu0 %v95
  %179 = vmatpush.xpose.msra.mxu0 %v94
  %180 = vmatpush.xpose.msra.mxu0 %v93
  %181 = vmatpush.xpose.msra.mxu0 %v92
  %182 = vmatpush.xpose.msra.mxu0 %v91
  %183 = vmatmul.f32.gmra.mxu0 %v42
  %v184 = vpop.f32.mrf.mxu0
  %v185 = vadd.f32 0.0, %v184
  %186 = vdwg.mxu0
  %v187 = vmax.f32 %v125, %v145
  %v188 = vmax.f32 %v165, %v185
  %v189 = vmax.f32 %v187, %v188
  %190 = vmax.xlane.f32.xlu0 %v189
  %v191 = vpop.xlane.xlu0 %190
  %v192 = vld [vmem:[#allocation2] sm:$0xff]
  %v193 = vmax.f32 %v192, %v191
  %v194 = vld [vmem:[#allocation3] sm:$0xff]
  %v195 = vsub.f32 %v192, %v193
  %v196 = vmul.f32 %v195, 1.442695
  %v197 = vpow.pop %v196
  %v198 = vmul.f32 %v194, %v197
  %200 = vset.pattern.permute.xlu0 0
  %201 = vperm.xlu0 %200, %v193
  %v202 = vpop.permute.xlu0 %201
  %v204 = vsub.f32 %v125, %v202
  %v205 = vsub.f32 %v145, %v202
  %v206 = vsub.f32 %v165, %v202
  %v207 = vsub.f32 %v185, %v202
  %v208 = vmul.f32 %v204, 1.442695
  %v209 = vpow.pop %v208
  %v210 = vmul.f32 %v205, 1.442695
  %v211 = vpow.pop %v210
  %v212 = vmul.f32 %v206, 1.442695
  %v213 = vpow.pop %v212
  %v214 = vmul.f32 %v207, 1.442695
  %v215 = vpow.pop %v214
  %v216 = vadd.f32 %v209, %v211
  %v217 = vadd.f32 %v216, %v213
  %v218 = vadd.f32 %v217, %v215
  %219 = vadd.xlane.f32.xlu0 %v218
  %v220 = vpop.xlane.xlu0 %219
  %v221 = vadd.f32 %v198, %v220
  %vm222 = vcmask 7168
  %223 = vst.msk [vmem:[#allocation3] sm:$0xff] %vm222, %v221
  %224 = vst.msk [vmem:[#allocation2] sm:$0xff] %vm222, %v193
  // Predicated region
  $region14: #{unsup_moco_loss.1} parent=0 // pred_check
    %p225 = pneg %p35
  $region15: #{unsup_moco_loss.1} parent=0 // pred_check_branch
    %227 = sbr.rel (%p225) target = $region17
  $region16: #{unsup_moco_loss.1} parent=0 // pred_region
    %v228 = vld [vmem:[#allocation2] sm:$0xff]
    %229 = vst.msk [vmem:[%s2] sm:$0xff] %vm222, %v228
    %v230 = vld [vmem:[#allocation3] sm:$0xff]
    %231 = vst.msk [vmem:[%s3] sm:$0xff] %vm222, %v230
  $region17: #{unsup_moco_loss.1} parent=0 // pred_fallthru
    _
  // Predicated region
  $region18: #{unsup_moco_loss.1} parent=0 // pred_check
    _
  $region19: #{unsup_moco_loss.1} parent=0 // pred_check_branch
    %233 = sbr.rel (0) target = $region21
  $region20: #{unsup_moco_loss.1} parent=0 // pred_region
    _
  $region21: #{unsup_moco_loss.1} parent=0 // pred_fallthru
    _
  // Predicated region
  $region22: #{unsup_moco_loss.1} parent=0 // pred_check
    _
  $region23: #{unsup_moco_loss.1} parent=0 // pred_check_branch
    %235 = sbr.rel (0) target = $region25
  $region24: #{unsup_moco_loss.1} parent=0 // pred_region
    _
  $region25: #{unsup_moco_loss.1} parent=0 // pred_fallthru
    _
  // Predicated region
  $region26: #{unsup_moco_loss.1} parent=0 // pred_check
    _
  $region27: #{unsup_moco_loss.1} parent=0 // pred_check_branch
    %237 = sbr.rel (0) target = $region29
  $region28: #{unsup_moco_loss.1} parent=0 // pred_region
    _
  $region29: #{unsup_moco_loss.1} parent=0 // pred_fallthru
    _
  // Predicated region
  $region30: #{unsup_moco_loss.1} parent=0 // pred_check
    _
  $region31: #{unsup_moco_loss.1} parent=0 // pred_check_branch
    %239 = sbr.rel (0) target = $region33
  $region32: #{unsup_moco_loss.1} parent=0 // pred_region
    _
  $region33: #{unsup_moco_loss.1} parent=0 // pred_fallthru
    _

</llo_original>
